<compile_context>
chip_gen: v7x
topology: tpu7x:2x2x1
jax: 0.10.0
libtpu: 0.0.40
codegen_flags: <defaults>
</compile_context>

<pallas_src>
import functools

import jax
import jax.numpy as jnp
from jax import lax
from jax.experimental import pallas as pl
from jax.experimental.pallas import tpu as pltpu


def _round_up(n, m):
    return ((n + m - 1) // m) * m


def _cdiv(a, b):
    return (a + b - 1) // b


def _pad_gate_cols(w_t, H, H_pad):
    """(rows, 4H) -> (rows, 4*H_pad): zero-pad each gate's column block to H_pad."""
    rows = w_t.shape[0]
    w4 = w_t.reshape(rows, 4, H)
    w4 = jnp.pad(w4, ((0, 0), (0, 0), (0, H_pad - H)))
    return w4.reshape(rows, 4 * H_pad)


def _sigmoid_one_eup(x):
    # sigmoid(x) == 0.5*tanh(0.5*x) + 0.5: exactly one EUP transcendental per
    # gate plus cheap VPU fixup (exp+divide lowerings cost >1 EUP push).
    return 0.5 * jnp.tanh(0.5 * x) + 0.5


def _lstm_recurrence_kernel(gx_ref, whh_ref, out_ref, h_scr, c_scr, *, unroll):
    # gx_ref:  (chunk_T, block_B, 4*H_pad) precomputed x@W_ih + b, time-major, stream dtype
    # whh_ref: (H_pad, 4*H_pad)            hidden->gates weights (resident, MXU dtype)
    # out_ref: (block_B, H_pad) f32        last hidden state for this batch block
    # h_scr/c_scr: (block_B, H_pad) f32 VMEM scratch, persistent across time chunks
    t_chunk = pl.program_id(1)

    @pl.when(t_chunk == 0)
    def _():
        h_scr[...] = jnp.zeros_like(h_scr)
        c_scr[...] = jnp.zeros_like(c_scr)

    whh = whh_ref[...]
    mxu_dtype = whh.dtype
    chunk_t = gx_ref.shape[0]
    Hp = h_scr.shape[1]

    def step(t, carry):
        h, c = carry
        # Only the hidden projection stays in the serial chain; the input
        # projection + bias were folded into gx_ref ahead of time.  MXU
        # operands in mxu_dtype (bf16 by default); accumulation + state in f32.
        gates = gx_ref[t].astype(jnp.float32) + jnp.dot(
            h.astype(mxu_dtype), whh, preferred_element_type=jnp.float32)
        # H_pad is a multiple of 128 -> these slices are lane-aligned (no
        # sub-vreg lane shuffles on the critical path).
        i_g = _sigmoid_one_eup(gates[:, 0 * Hp:1 * Hp])
        f_g = _sigmoid_one_eup(gates[:, 1 * Hp:2 * Hp])
        g_g = jnp.tanh(gates[:, 2 * Hp:3 * Hp])
        o_g = _sigmoid_one_eup(gates[:, 3 * Hp:4 * Hp])
        c_new = f_g * c + i_g * g_g
        h_new = o_g * jnp.tanh(c_new)
        return (h_new, c_new)

    # Partial unroll: lets the LLO scheduler overlap the next step's gx load
    # with the current step's MXU/EUP latency without blowing up live vregs.
    h, c = lax.fori_loop(0, chunk_t, step, (h_scr[...], c_scr[...]),
                         unroll=unroll)
    h_scr[...] = h
    c_scr[...] = c

    @pl.when(t_chunk == pl.num_programs(1) - 1)
    def _():
        out_ref[...] = h.astype(out_ref.dtype)


def lstm_last_step(x, w_ih, w_hh, b_ih, b_hh, *, chunk_t=None,
                   mxu_dtype=jnp.bfloat16):
    """x: (B, T, D_in) float32. Returns (B, H) — LSTM hidden state at the last step.

    mxu_dtype: dtype of the MXU matmul operands and of the streamed gates_x
    intermediate.  h/c state and all gate elementwise math stay float32.
    """
    B, T, D_in = x.shape
    four_h = w_ih.shape[0]
    H = four_h // 4

    mxu_dtype = jnp.dtype(mxu_dtype)
    stream_dtype = mxu_dtype                 # gates_x streamed in the same dtype
    H_pad = _round_up(H, 128)                # lane-aligned per-gate width

    # --- batch block: fill MXU rows / amortize the serial per-step latency ---
    sub = 16 if stream_dtype.itemsize == 2 else 8   # sublane packing of gx tiles
    block_b = min(64, _round_up(B, sub))
    # v7x: prefer two 32-row batch blocks over one 64-row block so both
    # TensorCores get work on the "parallel" batch axis.
    if _round_up(B, block_b) // block_b < 2 and block_b >= 64:
        block_b //= 2
    B_pad = _round_up(B, block_b)

    # --- time chunk: target ~32 steps/grid-iter, minimal padding, VMEM-capped ---
    if chunk_t is None:
        chunk_t = _cdiv(T, _cdiv(T, 32))     # smallest chunk giving ceil(T/32) chunks
    chunk_t = max(1, min(int(chunk_t), T))

    f32b = 4
    whh_vmem = 2 * H_pad * 4 * H_pad * mxu_dtype.itemsize          # (conservatively 2x)
    fixed_vmem = whh_vmem + 2 * block_b * H_pad * f32b + 2 * block_b * H_pad * f32b
    gx_vmem_per_t = 2 * block_b * 4 * H_pad * stream_dtype.itemsize  # double-buffered
    budget = 40 << 20                        # keeps v7x (64 MiB physical) safe w/ headroom
    chunk_t = max(1, min(chunk_t, (budget - fixed_vmem) // gx_vmem_per_t))
    vmem_limit = int(fixed_vmem + chunk_t * gx_vmem_per_t + (8 << 20))

    T_pad = _round_up(T, chunk_t)
    num_chunks = T_pad // chunk_t
    unroll = max(1, min(4, chunk_t))

    # --- parameter prep (zero padding keeps the real lanes' math exact) ---
    wih_t = _pad_gate_cols(jnp.transpose(w_ih), H, H_pad)           # (D_in, 4*H_pad)
    whh_t = _pad_gate_cols(jnp.transpose(w_hh), H, H_pad)           # (H,    4*H_pad)
    whh_t = jnp.pad(whh_t, ((0, H_pad - H), (0, 0)))                # (H_pad, 4*H_pad)
    whh_t = whh_t.astype(mxu_dtype)
    b = _pad_gate_cols((b_ih + b_hh).reshape(1, four_h), H, H_pad)  # (1, 4*H_pad)

    x_p = x if B_pad == B else jnp.pad(x, ((0, B_pad - B), (0, 0), (0, 0)))
    x_t = jnp.transpose(x_p, (1, 0, 2))                             # (T, B_pad, D_in)

    # --- one big MXU matmul for the input projection of ALL timesteps ---
    # Time-major operand => time-major 'tbg' output directly, so the wide
    # (T, B, 4*H_pad) result needs no transpose pass in HBM.
    gates_x = jnp.einsum('tbd,dg->tbg',
                         x_t.astype(mxu_dtype), wih_t.astype(mxu_dtype),
                         preferred_element_type=jnp.float32) + b    # f32 (T, B_pad, 4*H_pad)
    gates_x = gates_x.astype(stream_dtype)
    # LEFT-pad time with exact-zero pre-activations: with h=c=0 the pad steps
    # leave the state at exactly 0, so h_T is unchanged.
    if T_pad != T:
        gates_x = jnp.pad(gates_x, ((T_pad - T, 0), (0, 0), (0, 0)))
    # TODO(synk): for v5e / very long sequences, fuse x@W_ih into the kernel per
    #             time chunk (stream x, keep W_ih resident) to remove the
    #             gates_x HBM round-trip entirely; bf16 streaming already halves it.

    kernel = functools.partial(_lstm_recurrence_kernel, unroll=unroll)

    # --- streamed sequential recurrence ---
    out_p = pl.pallas_call(
        kernel,
        out_shape=jax.ShapeDtypeStruct((B_pad, H_pad), jnp.float32),
        grid_spec=pltpu.PrefetchScalarGridSpec(
            num_scalar_prefetch=0,
            grid=(B_pad // block_b, num_chunks),   # (batch blocks, time chunks)
            in_specs=[
                # gates_x streamed per (batch block, time chunk); double-buffered.
                pl.BlockSpec((chunk_t, block_b, 4 * H_pad),
                             lambda bb, tc: (tc, bb, 0)),
                # W_hh resident across the whole grid (constant index_map).
                # TODO(synk): for very large H on v7x, single-buffer W_hh
                #             (pipeline_mode=pl.Buffered(1) or one manual copy).
                pl.BlockSpec((H_pad, 4 * H_pad), lambda bb, tc: (0, 0)),
            ],
            out_specs=pl.BlockSpec((block_b, H_pad), lambda bb, tc: (bb, 0)),
            scratch_shapes=[pltpu.VMEM((block_b, H_pad), jnp.float32),
                            pltpu.VMEM((block_b, H_pad), jnp.float32)],
        ),
        compiler_params=pltpu.CompilerParams(
            # batch blocks are independent -> "parallel" (megacore-shardable);
            # time carries h/c in scratch -> "arbitrary".
            dimension_semantics=("parallel", "arbitrary"),
            vmem_limit_bytes=vmem_limit,
        ),
    )(gates_x, whh_t)

    return out_p[:B, :H]


def _lstm_last_step_ref(x, w_ih, w_hh, b_ih, b_hh):
    """Pure-JAX reference replicating torch.nn.LSTM (single layer) semantics."""
    B, T, D_in = x.shape
    H = w_ih.shape[0] // 4
    h = jnp.zeros((B, H), jnp.float32)
    c = jnp.zeros((B, H), jnp.float32)
    for t in range(T):
        gates = x[:, t, :] @ w_ih.T + h @ w_hh.T + b_ih + b_hh
        i_g = jax.nn.sigmoid(gates[:, 0 * H:1 * H])
        f_g = jax.nn.sigmoid(gates[:, 1 * H:2 * H])
        g_g = jnp.tanh(gates[:, 2 * H:3 * H])
        o_g = jax.nn.sigmoid(gates[:, 3 * H:4 * H])
        c = f_g * c + i_g * g_g
        h = o_g * jnp.tanh(c)
    return h


if __name__ == "__main__":
    # Small, deterministic setup: batch=2, seq=8, input=16, hidden=32.
    B, T, D_in, H = 2, 8, 16, 32
    key = jax.random.PRNGKey(0)
    kx, k1, k2, k3, k4 = jax.random.split(key, 5)

    x = jax.random.normal(kx, (B, T, D_in), dtype=jnp.float32)

    scale = 1.0 / jnp.sqrt(jnp.float32(H))
    w_ih = jax.random.uniform(k1, (4 * H, D_in), jnp.float32, -scale, scale)
    w_hh = jax.random.uniform(k2, (4 * H, H), jnp.float32, -scale, scale)
    b_ih = jax.random.uniform(k3, (4 * H,), jnp.float32, -scale, scale)
    b_hh = jax.random.uniform(k4, (4 * H,), jnp.float32, -scale, scale)

    ref = _lstm_last_step_ref(x, w_ih, w_hh, b_ih, b_hh)

    # (1) f32-MXU path with chunk_t=3 (does NOT divide T=8): exercises the time
    #     left-padding + multi-chunk scratch carry; tight tolerance.
    out_f32 = jax.block_until_ready(
        lstm_last_step(x, w_ih, w_hh, b_ih, b_hh, chunk_t=3,
                       mxu_dtype=jnp.float32))
    assert out_f32.shape == (B, H)
    assert jnp.allclose(out_f32, ref, atol=1e-4, rtol=1e-4), "f32 mismatch vs reference"

    # (2) default production path: bf16 MXU operands + bf16 gates_x streaming.
    #     Tolerance loosened for bf16 rounding accumulated over T steps.
    out_bf16 = jax.block_until_ready(
        lstm_last_step(x, w_ih, w_hh, b_ih, b_hh, chunk_t=3))
    assert out_bf16.shape == (B, H)
    assert jnp.allclose(out_bf16, ref, atol=5e-2, rtol=5e-2), "bf16 mismatch vs reference"

    print("KERNEL_OK")
</pallas_src>

<mosaic_0001>
module attributes {stable_mosaic.version = 11 : i64} {
  func.func @_lstm_recurrence_kernel(%arg0: i32, %arg1: i32, %arg2: memref<3x8x512xf32, #tpu.memory_space<vmem>>, %arg3: memref<128x512xf32, #tpu.memory_space<vmem>>, %arg4: memref<8x128xf32, #tpu.memory_space<vmem>>, %arg5: memref<8x128xf32, #tpu.memory_space<vmem>>, %arg6: memref<8x128xf32, #tpu.memory_space<vmem>>) attributes {dimension_semantics = [#tpu.dimension_semantics<parallel>, #tpu.dimension_semantics<arbitrary>], iteration_bounds = array<i64: 1, 3>, scalar_prefetch = 0 : i64, scratch_operands = 2 : i64, tpu.core_type = #tpu.core_type<tc>, window_params = [{transform_indices = @transform_0, window_bounds = array<i64: 3, 8, 512>}, {pipeline_mode = #tpu.pipeline_mode<synchronous>, transform_indices = @transform_1, window_bounds = array<i64: 128, 512>}, {transform_indices = @transform_2, window_bounds = array<i64: 8, 128>}]} {
    %c0_i32 = arith.constant 0 : i32
    %0 = arith.cmpi eq, %arg1, %c0_i32 : i32
    %1 = arith.extui %0 : i1 to i32
    %c0_i32_0 = arith.constant 0 : i32
    %2 = arith.cmpi ne, %1, %c0_i32_0 : i32
    scf.if %2 {
      %cst_48 = arith.constant 0.000000e+00 : f32
      %119 = vector.broadcast %cst_48 : f32 to vector<8x128xf32>
      %c0_49 = arith.constant 0 : index
      %c0_50 = arith.constant 0 : index
      %120 = vector.load %arg5[%c0_49, %c0_50] : memref<8x128xf32, #tpu.memory_space<vmem>>, vector<8x128xf32>
      tpu.vector_store %arg5[%c0_49, %c0_50], %119 {strides = array<i32>} : memref<8x128xf32, #tpu.memory_space<vmem>>, vector<8x128xf32>,
      %cst_51 = arith.constant 0.000000e+00 : f32
      %121 = vector.broadcast %cst_51 : f32 to vector<8x128xf32>
      %c0_52 = arith.constant 0 : index
      %c0_53 = arith.constant 0 : index
      %122 = vector.load %arg6[%c0_52, %c0_53] : memref<8x128xf32, #tpu.memory_space<vmem>>, vector<8x128xf32>
      tpu.vector_store %arg6[%c0_52, %c0_53], %121 {strides = array<i32>} : memref<8x128xf32, #tpu.memory_space<vmem>>, vector<8x128xf32>,
    } else {
    }
    %c0 = arith.constant 0 : index
    %c0_1 = arith.constant 0 : index
    %3 = vector.load %arg3[%c0, %c0_1] : memref<128x512xf32, #tpu.memory_space<vmem>>, vector<128x512xf32>
    %c0_2 = arith.constant 0 : index
    %c0_3 = arith.constant 0 : index
    %4 = vector.load %arg5[%c0_2, %c0_3] : memref<8x128xf32, #tpu.memory_space<vmem>>, vector<8x128xf32>
    %c0_4 = arith.constant 0 : index
    %c0_5 = arith.constant 0 : index
    %5 = vector.load %arg6[%c0_4, %c0_5] : memref<8x128xf32, #tpu.memory_space<vmem>>, vector<8x128xf32>
    %c0_i32_6 = arith.constant 0 : i32
    %6 = arith.index_cast %c0_i32_6 : i32 to index
    %c0_7 = arith.constant 0 : index
    %c0_8 = arith.constant 0 : index
    %7 = vector.load %arg2[%6, %c0_7, %c0_8] : memref<3x8x512xf32, #tpu.memory_space<vmem>>, vector<1x8x512xf32>
    %8 = vector.shape_cast %7 : vector<1x8x512xf32> to vector<8x512xf32>
    %cst = arith.constant dense<0.000000e+00> : vector<8x512xf32>
    %9 = tpu.matmul %4, %3, %cst {dimension_numbers = #tpu.dot_dimension_numbers<[1], [0], [0], [1], [0, 0, 1, 1], [], []>} : vector<8x128xf32>, vector<128x512xf32>, vector<8x512xf32> -> vector<8x512xf32>
    %10 = arith.addf %8, %9 : vector<8x512xf32>
    %11 = vector.extract_strided_slice %10 {offsets = [0, 0], sizes = [8, 128], strides = [1, 1]} : vector<8x512xf32> to vector<8x128xf32>
    %cst_9 = arith.constant 5.000000e-01 : f32
    %12 = vector.broadcast %cst_9 : f32 to vector<8x128xf32>
    %13 = arith.mulf %12, %11 : vector<8x128xf32>
    %14 = math.tanh %13 : vector<8x128xf32>
    %cst_10 = arith.constant 5.000000e-01 : f32
    %15 = vector.broadcast %cst_10 : f32 to vector<8x128xf32>
    %16 = arith.mulf %15, %14 : vector<8x128xf32>
    %cst_11 = arith.constant 5.000000e-01 : f32
    %17 = vector.broadcast %cst_11 : f32 to vector<8x128xf32>
    %18 = arith.addf %16, %17 : vector<8x128xf32>
    %19 = vector.extract_strided_slice %10 {offsets = [0, 128], sizes = [8, 128], strides = [1, 1]} : vector<8x512xf32> to vector<8x128xf32>
    %cst_12 = arith.constant 5.000000e-01 : f32
    %20 = vector.broadcast %cst_12 : f32 to vector<8x128xf32>
    %21 = arith.mulf %20, %19 : vector<8x128xf32>
    %22 = math.tanh %21 : vector<8x128xf32>
    %cst_13 = arith.constant 5.000000e-01 : f32
    %23 = vector.broadcast %cst_13 : f32 to vector<8x128xf32>
    %24 = arith.mulf %23, %22 : vector<8x128xf32>
    %cst_14 = arith.constant 5.000000e-01 : f32
    %25 = vector.broadcast %cst_14 : f32 to vector<8x128xf32>
    %26 = arith.addf %24, %25 : vector<8x128xf32>
    %27 = vector.extract_strided_slice %10 {offsets = [0, 256], sizes = [8, 128], strides = [1, 1]} : vector<8x512xf32> to vector<8x128xf32>
    %28 = math.tanh %27 : vector<8x128xf32>
    %29 = vector.extract_strided_slice %10 {offsets = [0, 384], sizes = [8, 128], strides = [1, 1]} : vector<8x512xf32> to vector<8x128xf32>
    %cst_15 = arith.constant 5.000000e-01 : f32
    %30 = vector.broadcast %cst_15 : f32 to vector<8x128xf32>
    %31 = arith.mulf %30, %29 : vector<8x128xf32>
    %32 = math.tanh %31 : vector<8x128xf32>
    %cst_16 = arith.constant 5.000000e-01 : f32
    %33 = vector.broadcast %cst_16 : f32 to vector<8x128xf32>
    %34 = arith.mulf %33, %32 : vector<8x128xf32>
    %cst_17 = arith.constant 5.000000e-01 : f32
    %35 = vector.broadcast %cst_17 : f32 to vector<8x128xf32>
    %36 = arith.addf %34, %35 : vector<8x128xf32>
    %37 = arith.mulf %26, %5 : vector<8x128xf32>
    %38 = arith.mulf %18, %28 : vector<8x128xf32>
    %39 = arith.addf %37, %38 : vector<8x128xf32>
    %40 = math.tanh %39 : vector<8x128xf32>
    %41 = arith.mulf %36, %40 : vector<8x128xf32>
    %c1_i32 = arith.constant 1 : i32
    %42 = arith.index_cast %c1_i32 : i32 to index
    %c0_18 = arith.constant 0 : index
    %c0_19 = arith.constant 0 : index
    %43 = vector.load %arg2[%42, %c0_18, %c0_19] : memref<3x8x512xf32, #tpu.memory_space<vmem>>, vector<1x8x512xf32>
    %44 = vector.shape_cast %43 : vector<1x8x512xf32> to vector<8x512xf32>
    %cst_20 = arith.constant dense<0.000000e+00> : vector<8x512xf32>
    %45 = tpu.matmul %41, %3, %cst_20 {dimension_numbers = #tpu.dot_dimension_numbers<[1], [0], [0], [1], [0, 0, 1, 1], [], []>} : vector<8x128xf32>, vector<128x512xf32>, vector<8x512xf32> -> vector<8x512xf32>
    %46 = arith.addf %44, %45 : vector<8x512xf32>
    %47 = vector.extract_strided_slice %46 {offsets = [0, 0], sizes = [8, 128], strides = [1, 1]} : vector<8x512xf32> to vector<8x128xf32>
    %cst_21 = arith.constant 5.000000e-01 : f32
    %48 = vector.broadcast %cst_21 : f32 to vector<8x128xf32>
    %49 = arith.mulf %48, %47 : vector<8x128xf32>
    %50 = math.tanh %49 : vector<8x128xf32>
    %cst_22 = arith.constant 5.000000e-01 : f32
    %51 = vector.broadcast %cst_22 : f32 to vector<8x128xf32>
    %52 = arith.mulf %51, %50 : vector<8x128xf32>
    %cst_23 = arith.constant 5.000000e-01 : f32
    %53 = vector.broadcast %cst_23 : f32 to vector<8x128xf32>
    %54 = arith.addf %52, %53 : vector<8x128xf32>
    %55 = vector.extract_strided_slice %46 {offsets = [0, 128], sizes = [8, 128], strides = [1, 1]} : vector<8x512xf32> to vector<8x128xf32>
    %cst_24 = arith.constant 5.000000e-01 : f32
    %56 = vector.broadcast %cst_24 : f32 to vector<8x128xf32>
    %57 = arith.mulf %56, %55 : vector<8x128xf32>
    %58 = math.tanh %57 : vector<8x128xf32>
    %cst_25 = arith.constant 5.000000e-01 : f32
    %59 = vector.broadcast %cst_25 : f32 to vector<8x128xf32>
    %60 = arith.mulf %59, %58 : vector<8x128xf32>
    %cst_26 = arith.constant 5.000000e-01 : f32
    %61 = vector.broadcast %cst_26 : f32 to vector<8x128xf32>
    %62 = arith.addf %60, %61 : vector<8x128xf32>
    %63 = vector.extract_strided_slice %46 {offsets = [0, 256], sizes = [8, 128], strides = [1, 1]} : vector<8x512xf32> to vector<8x128xf32>
    %64 = math.tanh %63 : vector<8x128xf32>
    %65 = vector.extract_strided_slice %46 {offsets = [0, 384], sizes = [8, 128], strides = [1, 1]} : vector<8x512xf32> to vector<8x128xf32>
    %cst_27 = arith.constant 5.000000e-01 : f32
    %66 = vector.broadcast %cst_27 : f32 to vector<8x128xf32>
    %67 = arith.mulf %66, %65 : vector<8x128xf32>
    %68 = math.tanh %67 : vector<8x128xf32>
    %cst_28 = arith.constant 5.000000e-01 : f32
    %69 = vector.broadcast %cst_28 : f32 to vector<8x128xf32>
    %70 = arith.mulf %69, %68 : vector<8x128xf32>
    %cst_29 = arith.constant 5.000000e-01 : f32
    %71 = vector.broadcast %cst_29 : f32 to vector<8x128xf32>
    %72 = arith.addf %70, %71 : vector<8x128xf32>
    %73 = arith.mulf %62, %39 : vector<8x128xf32>
    %74 = arith.mulf %54, %64 : vector<8x128xf32>
    %75 = arith.addf %73, %74 : vector<8x128xf32>
    %76 = math.tanh %75 : vector<8x128xf32>
    %77 = arith.mulf %72, %76 : vector<8x128xf32>
    %c2_i32 = arith.constant 2 : i32
    %78 = arith.index_cast %c2_i32 : i32 to index
    %c0_30 = arith.constant 0 : index
    %c0_31 = arith.constant 0 : index
    %79 = vector.load %arg2[%78, %c0_30, %c0_31] : memref<3x8x512xf32, #tpu.memory_space<vmem>>, vector<1x8x512xf32>
    %80 = vector.shape_cast %79 : vector<1x8x512xf32> to vector<8x512xf32>
    %cst_32 = arith.constant dense<0.000000e+00> : vector<8x512xf32>
    %81 = tpu.matmul %77, %3, %cst_32 {dimension_numbers = #tpu.dot_dimension_numbers<[1], [0], [0], [1], [0, 0, 1, 1], [], []>} : vector<8x128xf32>, vector<128x512xf32>, vector<8x512xf32> -> vector<8x512xf32>
    %82 = arith.addf %80, %81 : vector<8x512xf32>
    %83 = vector.extract_strided_slice %82 {offsets = [0, 0], sizes = [8, 128], strides = [1, 1]} : vector<8x512xf32> to vector<8x128xf32>
    %cst_33 = arith.constant 5.000000e-01 : f32
    %84 = vector.broadcast %cst_33 : f32 to vector<8x128xf32>
    %85 = arith.mulf %84, %83 : vector<8x128xf32>
    %86 = math.tanh %85 : vector<8x128xf32>
    %cst_34 = arith.constant 5.000000e-01 : f32
    %87 = vector.broadcast %cst_34 : f32 to vector<8x128xf32>
    %88 = arith.mulf %87, %86 : vector<8x128xf32>
    %cst_35 = arith.constant 5.000000e-01 : f32
    %89 = vector.broadcast %cst_35 : f32 to vector<8x128xf32>
    %90 = arith.addf %88, %89 : vector<8x128xf32>
    %91 = vector.extract_strided_slice %82 {offsets = [0, 128], sizes = [8, 128], strides = [1, 1]} : vector<8x512xf32> to vector<8x128xf32>
    %cst_36 = arith.constant 5.000000e-01 : f32
    %92 = vector.broadcast %cst_36 : f32 to vector<8x128xf32>
    %93 = arith.mulf %92, %91 : vector<8x128xf32>
    %94 = math.tanh %93 : vector<8x128xf32>
    %cst_37 = arith.constant 5.000000e-01 : f32
    %95 = vector.broadcast %cst_37 : f32 to vector<8x128xf32>
    %96 = arith.mulf %95, %94 : vector<8x128xf32>
    %cst_38 = arith.constant 5.000000e-01 : f32
    %97 = vector.broadcast %cst_38 : f32 to vector<8x128xf32>
    %98 = arith.addf %96, %97 : vector<8x128xf32>
    %99 = vector.extract_strided_slice %82 {offsets = [0, 256], sizes = [8, 128], strides = [1, 1]} : vector<8x512xf32> to vector<8x128xf32>
    %100 = math.tanh %99 : vector<8x128xf32>
    %101 = vector.extract_strided_slice %82 {offsets = [0, 384], sizes = [8, 128], strides = [1, 1]} : vector<8x512xf32> to vector<8x128xf32>
    %cst_39 = arith.constant 5.000000e-01 : f32
    %102 = vector.broadcast %cst_39 : f32 to vector<8x128xf32>
    %103 = arith.mulf %102, %101 : vector<8x128xf32>
    %104 = math.tanh %103 : vector<8x128xf32>
    %cst_40 = arith.constant 5.000000e-01 : f32
    %105 = vector.broadcast %cst_40 : f32 to vector<8x128xf32>
    %106 = arith.mulf %105, %104 : vector<8x128xf32>
    %cst_41 = arith.constant 5.000000e-01 : f32
    %107 = vector.broadcast %cst_41 : f32 to vector<8x128xf32>
    %108 = arith.addf %106, %107 : vector<8x128xf32>
    %109 = arith.mulf %98, %75 : vector<8x128xf32>
    %110 = arith.mulf %90, %100 : vector<8x128xf32>
    %111 = arith.addf %109, %110 : vector<8x128xf32>
    %112 = math.tanh %111 : vector<8x128xf32>
    %113 = arith.mulf %108, %112 : vector<8x128xf32>
    %c3_i32 = arith.constant 3 : i32
    %c0_42 = arith.constant 0 : index
    %c0_43 = arith.constant 0 : index
    %114 = vector.load %arg5[%c0_42, %c0_43] : memref<8x128xf32, #tpu.memory_space<vmem>>, vector<8x128xf32>
    tpu.vector_store %arg5[%c0_42, %c0_43], %113 {strides = array<i32>} : memref<8x128xf32, #tpu.memory_space<vmem>>, vector<8x128xf32>,
    %c0_44 = arith.constant 0 : index
    %c0_45 = arith.constant 0 : index
    %115 = vector.load %arg6[%c0_44, %c0_45] : memref<8x128xf32, #tpu.memory_space<vmem>>, vector<8x128xf32>
    tpu.vector_store %arg6[%c0_44, %c0_45], %111 {strides = array<i32>} : memref<8x128xf32, #tpu.memory_space<vmem>>, vector<8x128xf32>,
    %c2_i32_46 = arith.constant 2 : i32
    %116 = arith.cmpi eq, %arg1, %c2_i32_46 : i32
    %117 = arith.extui %116 : i1 to i32
    %c0_i32_47 = arith.constant 0 : i32
    %118 = arith.cmpi ne, %117, %c0_i32_47 : i32
    scf.if %118 {
      %c0_48 = arith.constant 0 : index
      %c0_49 = arith.constant 0 : index
      %119 = vector.load %arg4[%c0_48, %c0_49] : memref<8x128xf32, #tpu.memory_space<vmem>>, vector<8x128xf32>
      tpu.vector_store %arg4[%c0_48, %c0_49], %113 {strides = array<i32>} : memref<8x128xf32, #tpu.memory_space<vmem>>, vector<8x128xf32>,
    } else {
    }
    return
  }
  func.func @transform_0(%arg0: i32, %arg1: i32) -> (i32, i32, i32) {
    %c0_i32 = arith.constant 0 : i32
    %c0_i32_0 = arith.constant 0 : i32
    return %arg1, %arg0, %c0_i32 : i32, i32, i32
  }
  func.func @transform_1(%arg0: i32, %arg1: i32) -> (i32, i32) {
    %c0_i32 = arith.constant 0 : i32
    %c0_i32_0 = arith.constant 0 : i32
    %c0_i32_1 = arith.constant 0 : i32
    return %c0_i32, %c0_i32_0 : i32, i32
  }
  func.func @transform_2(%arg0: i32, %arg1: i32) -> (i32, i32) {
    %c0_i32 = arith.constant 0 : i32
    %c0_i32_0 = arith.constant 0 : i32
    return %arg0, %c0_i32 : i32, i32
  }
}

</mosaic_0001>

<llo_original>
// kernel: tpu_custom_call.1
$region0: #{tpu_custom_call.1}
  #allocation0 [shape = 'u32[]', space=smem, size = 0x4, offset = 0x4, fixed_abs, tag = 'smem constant byte address 0x4 - core index']
  #allocation1 [shape = 'u32[144,128]{1,0:T(1,128)}', space=vmem, size = 0x12000, scoped, tag = 'internal scratch']
  #allocation2 [shape = 'f32[8,128]{1,0:T(8,128)}', space=vmem, size = 0x1000, scoped, tag = 'scratch operand']
  #allocation3 [shape = 'f32[8,128]{1,0:T(8,128)}', space=vmem, size = 0x1000, scoped, tag = 'scratch operand']
  %s0 = inlined_call_operand.hbm [shape: f32[9,8,512], index: 0, kind: input, shape index: {}]
  %s1 = inlined_call_operand.hbm [shape: f32[128,512], index: 1, kind: input, shape index: {}]
  %s2 = inlined_call_operand.hbm [shape: f32[8,128], index: 2, kind: output, shape index: {}]
  %s3 = sld [smem:[#allocation0]]
  $region57: #{tpu_custom_call.1} parent=0
    _
  %s5 = ssub.s32 1, %s3
  %s6 = scalar_select 0, %s5, %s3
  $region1: #{tpu_custom_call.1} parent=0
    #allocation4 [shape = 'u8[98304]{0}', space=vmem, size = 0x18000, scoped, tag = 'input window, operand 0']
    #allocation5 [shape = 's32[2]{0}', space=sflag, size = 0x8, scoped, tag = 'scoped memory for tpu_custom_call.1']
    #allocation6 [shape = 's32[2]{0}', space=sflag, size = 0x8, scoped, tag = 'scoped memory for tpu_custom_call.1']
    #allocation7 [shape = 'u8[262144]{0}', space=vmem, size = 0x40000, scoped, tag = 'input window, operand 1, single buffered']
    #allocation8 [shape = 's32[1]{0}', space=sflag, size = 0x4, scoped, tag = 'scoped memory for tpu_custom_call.1']
    #allocation9 [shape = 'u8[4096]{0}', space=vmem, size = 0x1000, scoped, tag = 'output window, operand 0, single buffered']
    %7 = vsyncpa [#allocation5], 0
    %s8 = scalar_lea.sflag [#allocation5], 1
    %9 = vsyncpa %s8, 0
    %10 = vsyncpa [#allocation8], 0
    %11 = vsyncpa [#allocation6], 0
    loop: start=0, step=1, limit=5
    $region2: #{tpu_custom_call.1} parent=1 // loop_pre_header
      _
    $region3: #{tpu_custom_call.1} parent=1 // loop_header
      %s13 = sphi 0, %s17
      %p14 = scmp.ge.s32.totalorder %s13, 5
      %s20 = sphi 0, %s32
      %s21 = sphi 0, %s28
      %s22 = sphi 0, %s20
      %s23 = sphi 0, %s21
      %s24 = sphi 0, %s22
      %s25 = sphi 0, %s23
      %s37 = sphi 0, %s39
      %s40 = sphi 0, %s37
      %s41 = sphi 0, %s40
      %s57 = sphi 0, %s41
      %s61 = sphi 0, %s61
      %s63 = sphi 0, %s61
      %s64 = sphi 0, %s63
      %s78 = sphi 0, %s64
      %s84 = sphi 0, %s86
      %s87 = sphi 0, %s84
      %s88 = sphi 0, %s87
      %s104 = sphi 0, %s88
    $region4: #{tpu_custom_call.1} parent=1 // loop_header_branch
      %16 = sbr.rel (%p14) target = $region8
    $region5: #{tpu_custom_call.1} parent=1 // loop_body
      %s18 = ssub.s32 %s13, 1
      %s19 = ssub.s32 %s13, 2
      %s26 = sadd.s32 1, %s21
      %p27 = scmp.ge.s32.totalorder %s26, 3
      %s28 = scalar_select %p27, 0, %s26
      %s29 = sadd.s32 1, %s20
      %s30 = scalar_select %p27, %s29, %s20
      %p31 = scmp.ge.s32.totalorder %s30, 1
      %s32 = scalar_select %p31, 0, %s30
      %s33 = ssub.s32 %s21, %s28
      %s34 = ssub.s32 %s20, %s32
      %s35 = sor.u32 %s33, %s34
      %p36 = scmp.eq.s32.totalorder %s35, 0
      %s38 = sadd.s32 %s37, 1
      %s39 = scalar_select %p36, %s37, %s38
      %p42 = pneg %p36
      %p43 = scmp.eq.s32.totalorder %s13, 2
      %p44 = por %p42, %p43
      %p45 = scmp.ne.s32.totalorder %s37, %s40
      %p46 = scmp.eq.s32.totalorder %s13, 0
      %p47 = por %p45, %p46
      %p48 = scmp.ne.s32.totalorder %s37, %s40
      %p49 = scmp.eq.s32.totalorder %s18, 2
      %p50 = por %p48, %p49
      %p51 = scmp.ne.s32.totalorder %s40, %s41
      %p52 = scmp.eq.s32.totalorder %s18, 0
      %p53 = por %p51, %p52
      %p54 = scmp.ne.s32.totalorder %s40, %s41
      %p55 = scmp.eq.s32.totalorder %s19, 2
      %p56 = por %p54, %p55
      %p58 = scmp.ne.s32.totalorder %s41, %s57
      %p59 = scmp.eq.s32.totalorder %s19, 0
      %p60 = por %p58, %p59
      %s62 = sadd.s32 %s61, 1
      %p65 = scmp.eq.s32.totalorder %s13, 2
      %p66 = scmp.ne.s32.totalorder %s61, %s63
      %p67 = scmp.eq.s32.totalorder %s13, 0
      %p68 = por %p66, %p67
      %p69 = scmp.ne.s32.totalorder %s61, %s63
      %p70 = scmp.eq.s32.totalorder %s18, 2
      %p71 = por %p69, %p70
      %p72 = scmp.ne.s32.totalorder %s63, %s64
      %p73 = scmp.eq.s32.totalorder %s18, 0
      %p74 = por %p72, %p73
      %p75 = scmp.ne.s32.totalorder %s63, %s64
      %p76 = scmp.eq.s32.totalorder %s19, 2
      %p77 = por %p75, %p76
      %p79 = scmp.ne.s32.totalorder %s64, %s78
      %p80 = scmp.eq.s32.totalorder %s19, 0
      %p81 = por %p79, %p80
      %s82 = ssub.s32 %s20, %s32
      %p83 = scmp.eq.s32.totalorder %s82, 0
      %s85 = sadd.s32 %s84, 1
      %s86 = scalar_select %p83, %s84, %s85
      %p89 = pneg %p83
      %p90 = scmp.eq.s32.totalorder %s13, 2
      %p91 = por %p89, %p90
      %p92 = scmp.ne.s32.totalorder %s84, %s87
      %p93 = scmp.eq.s32.totalorder %s13, 0
      %p94 = por %p92, %p93
      %p95 = scmp.ne.s32.totalorder %s84, %s87
      %p96 = scmp.eq.s32.totalorder %s18, 2
      %p97 = por %p95, %p96
      %p98 = scmp.ne.s32.totalorder %s87, %s88
      %p99 = scmp.eq.s32.totalorder %s18, 0
      %p100 = por %p98, %p99
      %p101 = scmp.ne.s32.totalorder %s87, %s88
      %p102 = scmp.eq.s32.totalorder %s19, 2
      %p103 = por %p101, %p102
      %p105 = scmp.ne.s32.totalorder %s88, %s104
      %p106 = scmp.eq.s32.totalorder %s19, 0
      %p107 = por %p105, %p106
      %p108 = scmp.le.s32.totalorder 1, %s13
      %p109 = scmp.lt.s32.totalorder %s13, 4
      %p110 = pnand %p108, %p109
      %p111 = pneg %p110
      // Predicated region
      $region9: #{tpu_custom_call.1} parent=5 // pred_check
        _
      $region10: #{tpu_custom_call.1} parent=5 // pred_check_branch
        %113 = sbr.rel (%p110) target = $region12
      $region11: #{tpu_custom_call.1} parent=5 // pred_region
        %s114 = ssub.s32 %s13, 1
        // Predicated region
        $region13: #{tpu_custom_call.1} parent=11 // pred_check
          %p115 = pneg %p74
        $region14: #{tpu_custom_call.1} parent=11 // pred_check_branch
          %117 = sbr.rel (%p115) target = $region16
        $region15: #{tpu_custom_call.1} parent=11 // pred_region
          %s119 = ssub.s32 8192, 8192
          %120 = vsyncadd [#allocation8], %s119
          %s121 = sshll.u32 [#allocation7], 4
          %s122 = int_to_ptr.vmem [resolvable:$true] %s121
          %127 = dma.hbm_to_vmem [thread:$0]  %s1, 8192, %s122, [#allocation8], 512, 512, 32
        $region16: #{tpu_custom_call.1} parent=11 // pred_fallthru
          _
      $region12: #{tpu_custom_call.1} parent=5 // pred_fallthru
        _
      %p128 = scmp.lt.s32.totalorder %s13, 3
      // Predicated region
      $region17: #{tpu_custom_call.1} parent=5 // pred_check
        %p129 = pneg %p128
      $region18: #{tpu_custom_call.1} parent=5 // pred_check_branch
        %131 = sbr.rel (%p129) target = $region20
      $region19: #{tpu_custom_call.1} parent=5 // pred_region
        // Predicated region
        $region21: #{tpu_custom_call.1} parent=19 // pred_check
          %p132 = pneg %p47
        $region22: #{tpu_custom_call.1} parent=19 // pred_check_branch
          %134 = sbr.rel (%p132) target = $region24
        $region23: #{tpu_custom_call.1} parent=19 // pred_region
          %s135 = sand.u32 %s37, 1
          %s136 = scalar_lea.sflag [#allocation5], %s135
          %s137 = sand.u32 %s37, 1
          %s138 = smul.addr %s137, 96
          %s139 = scalar_lea.vmem [#allocation4], %s138
          %s140 = smul.u32 3, %s21
          %s142 = ssub.s32 1536, 1536
          %143 = vsyncadd %s136, %s142
          %s144 = smul.addr %s20, 4
          %s145 = smul.addr %s140, 4
          %s146 = sadd.s32 %s144, %s145
          %s147 = smul.addr %s146, 128
          %s148 = scalar_lea.hbm %s0, %s147
          %s149 = sshll.u32 %s139, 4
          %s150 = int_to_ptr.vmem [resolvable:$true] %s149
          %155 = dma.hbm_to_vmem [thread:$0]  %s148, 1536, %s150, %s136, 512, 512, 32
        $region24: #{tpu_custom_call.1} parent=19 // pred_fallthru
          _
      $region20: #{tpu_custom_call.1} parent=5 // pred_fallthru
        _
      %p156 = scmp.le.s32.totalorder 1, %s13
      %p157 = scmp.lt.s32.totalorder %s13, 4
      %p158 = pnand %p156, %p157
      %p159 = pneg %p158
      // Predicated region
      $region25: #{tpu_custom_call.1} parent=5 // pred_check
        _
      $region26: #{tpu_custom_call.1} parent=5 // pred_check_branch
        %161 = sbr.rel (%p158) target = $region28
      $region27: #{tpu_custom_call.1} parent=5 // pred_region
        %s162 = ssub.s32 %s13, 1
        %s163 = sand.u32 %s40, 1
        %s164 = scalar_lea.sflag [#allocation5], %s163
        %s165 = sand.u32 %s40, 1
        %s166 = smul.addr %s165, 96
        %s167 = scalar_lea.vmem [#allocation4], %s166
        // Predicated region
        $region29: #{tpu_custom_call.1} parent=27 // pred_check
          %p168 = pneg %p53
        $region30: #{tpu_custom_call.1} parent=27 // pred_check_branch
          %170 = sbr.rel (%p168) target = $region32
        $region31: #{tpu_custom_call.1} parent=27 // pred_region
          %171 = dma.done %s164, 1536
        $region32: #{tpu_custom_call.1} parent=27 // pred_fallthru
          _
        // Predicated region
        $region33: #{tpu_custom_call.1} parent=27 // pred_check
          %p172 = pneg %p74
        $region34: #{tpu_custom_call.1} parent=27 // pred_check_branch
          %174 = sbr.rel (%p172) target = $region36
        $region35: #{tpu_custom_call.1} parent=27 // pred_region
          %175 = dma.done [#allocation8], 8192
        $region36: #{tpu_custom_call.1} parent=27 // pred_fallthru
          _
        %s176 = sand.u32 %s40, 1
        %s177 = scalar_lea.sflag [#allocation5], %s176
        %s178 = sand.u32 %s40, 1
        %s179 = smul.addr %s178, 96
        %s180 = scalar_lea.vmem [#allocation4], %s179
        %p181 = pneg %p53
        %p182 = pneg %p50
        %p183 = pneg %p74
        %p184 = pneg %p71
        %p185 = pneg %p100
        %p186 = pneg %p97
        %s187 = smul.u32 3, %s23
        %p188 = scmp.eq.s32.totalorder %s23, 0
        // Predicated region
        $region37: #{tpu_custom_call.1} parent=27 // pred_check
          %p189 = pneg %p188
        $region38: #{tpu_custom_call.1} parent=27 // pred_check_branch
          %191 = sbr.rel (%p189) target = $region40
        $region39: #{tpu_custom_call.1} parent=27 // pred_region
          %192 = vst [vmem:[#allocation2] sm:$0xff] 0.0
          %193 = vst [vmem:[#allocation3] sm:$0xff] 0.0
        $region40: #{tpu_custom_call.1} parent=27 // pred_fallthru
          _
        %v194 = vld [vmem:[#allocation7] sm:$0xff]
        %v195 = vld [vmem:[#allocation7 + $0x8] sm:$0xff]
        %v196 = vld [vmem:[#allocation7 + $0x10] sm:$0xff]
        %v197 = vld [vmem:[#allocation7 + $0x18] sm:$0xff]
        %v198 = vld [vmem:[#allocation7 + $0x20] sm:$0xff]
        %v199 = vld [vmem:[#allocation7 + $0x28] sm:$0xff]
        %v200 = vld [vmem:[#allocation7 + $0x30] sm:$0xff]
        %v201 = vld [vmem:[#allocation7 + $0x38] sm:$0xff]
        %v202 = vld [vmem:[#allocation7 + $0x40] sm:$0xff]
        %v203 = vld [vmem:[#allocation7 + $0x48] sm:$0xff]
        %v204 = vld [vmem:[#allocation7 + $0x50] sm:$0xff]
        %v205 = vld [vmem:[#allocation7 + $0x58] sm:$0xff]
        %v206 = vld [vmem:[#allocation7 + $0x60] sm:$0xff]
        %v207 = vld [vmem:[#allocation7 + $0x68] sm:$0xff]
        %v208 = vld [vmem:[#allocation7 + $0x70] sm:$0xff]
        %v209 = vld [vmem:[#allocation7 + $0x78] sm:$0xff]
        %v210 = vld [vmem:[#allocation7 + $0x80] sm:$0xff]
        %v211 = vld [vmem:[#allocation7 + $0x88] sm:$0xff]
        %v212 = vld [vmem:[#allocation7 + $0x90] sm:$0xff]
        %v213 = vld [vmem:[#allocation7 + $0x98] sm:$0xff]
        %v214 = vld [vmem:[#allocation7 + $0xa0] sm:$0xff]
        %v215 = vld [vmem:[#allocation7 + $0xa8] sm:$0xff]
        %v216 = vld [vmem:[#allocation7 + $0xb0] sm:$0xff]
        %v217 = vld [vmem:[#allocation7 + $0xb8] sm:$0xff]
        %v218 = vld [vmem:[#allocation7 + $0xc0] sm:$0xff]
        %v219 = vld [vmem:[#allocation7 + $0xc8] sm:$0xff]
        %v220 = vld [vmem:[#allocation7 + $0xd0] sm:$0xff]
        %v221 = vld [vmem:[#allocation7 + $0xd8] sm:$0xff]
        %v222 = vld [vmem:[#allocation7 + $0xe0] sm:$0xff]
        %v223 = vld [vmem:[#allocation7 + $0xe8] sm:$0xff]
        %v224 = vld [vmem:[#allocation7 + $0xf0] sm:$0xff]
        %v225 = vld [vmem:[#allocation7 + $0xf8] sm:$0xff]
        %v226 = vld [vmem:[#allocation7 + $0x100] sm:$0xff]
        %v227 = vld [vmem:[#allocation7 + $0x108] sm:$0xff]
        %v228 = vld [vmem:[#allocation7 + $0x110] sm:$0xff]
        %v229 = vld [vmem:[#allocation7 + $0x118] sm:$0xff]
        %v230 = vld [vmem:[#allocation7 + $0x120] sm:$0xff]
        %v231 = vld [vmem:[#allocation7 + $0x128] sm:$0xff]
        %v232 = vld [vmem:[#allocation7 + $0x130] sm:$0xff]
        %v233 = vld [vmem:[#allocation7 + $0x138] sm:$0xff]
        %v234 = vld [vmem:[#allocation7 + $0x140] sm:$0xff]
        %v235 = vld [vmem:[#allocation7 + $0x148] sm:$0xff]
        %v236 = vld [vmem:[#allocation7 + $0x150] sm:$0xff]
        %v237 = vld [vmem:[#allocation7 + $0x158] sm:$0xff]
        %v238 = vld [vmem:[#allocation7 + $0x160] sm:$0xff]
        %v239 = vld [vmem:[#allocation7 + $0x168] sm:$0xff]
        %v240 = vld [vmem:[#allocation7 + $0x170] sm:$0xff]
        %v241 = vld [vmem:[#allocation7 + $0x178] sm:$0xff]
        %v242 = vld [vmem:[#allocation7 + $0x180] sm:$0xff]
        %v243 = vld [vmem:[#allocation7 + $0x188] sm:$0xff]
        %v244 = vld [vmem:[#allocation7 + $0x190] sm:$0xff]
        %v245 = vld [vmem:[#allocation7 + $0x198] sm:$0xff]
        %v246 = vld [vmem:[#allocation7 + $0x1a0] sm:$0xff]
        %v247 = vld [vmem:[#allocation7 + $0x1a8] sm:$0xff]
        %v248 = vld [vmem:[#allocation7 + $0x1b0] sm:$0xff]
        %v249 = vld [vmem:[#allocation7 + $0x1b8] sm:$0xff]
        %v250 = vld [vmem:[#allocation7 + $0x1c0] sm:$0xff]
        %v251 = vld [vmem:[#allocation7 + $0x1c8] sm:$0xff]
        %v252 = vld [vmem:[#allocation7 + $0x1d0] sm:$0xff]
        %v253 = vld [vmem:[#allocation7 + $0x1d8] sm:$0xff]
        %v254 = vld [vmem:[#allocation7 + $0x1e0] sm:$0xff]
        %v255 = vld [vmem:[#allocation7 + $0x1e8] sm:$0xff]
        %v256 = vld [vmem:[#allocation7 + $0x1f0] sm:$0xff]
        %v257 = vld [vmem:[#allocation7 + $0x1f8] sm:$0xff]
        %v258 = vld [vmem:[#allocation2] sm:$0xff]
        %v259 = vld [vmem:[#allocation3] sm:$0xff]
        %v260 = vld [vmem:[%s167] sm:$0xff]
        %v261 = vld [vmem:[%s167 + $0x8] sm:$0xff]
        %v262 = vld [vmem:[%s167 + $0x10] sm:$0xff]
        %v263 = vld [vmem:[%s167 + $0x18] sm:$0xff]
        %264 = vmatprep.subr.mxu0 %v195
        %265 = vmatpush1.msra.mxu0 %v194
        %266 = vmatprep.subr.mxu0 %v199
        %267 = vmatpush1.msra.mxu0 %v198
        %268 = vmatprep.subr.mxu0 %v203
        %269 = vmatpush1.msra.mxu0 %v202
        %270 = vmatprep.subr.mxu0 %v207
        %271 = vmatpush1.msra.mxu0 %v206
        %272 = vmatprep.subr.mxu0 %v211
        %273 = vmatpush1.msra.mxu0 %v210
        %274 = vmatprep.subr.mxu0 %v215
        %275 = vmatpush1.msra.mxu0 %v214
        %276 = vmatprep.subr.mxu0 %v219
        %277 = vmatpush1.msra.mxu0 %v218
        %278 = vmatprep.subr.mxu0 %v223
        %279 = vmatpush1.msra.mxu0 %v222
        %280 = vmatprep.subr.mxu0 %v227
        %281 = vmatpush1.msra.mxu0 %v226
        %282 = vmatprep.subr.mxu0 %v231
        %283 = vmatpush1.msra.mxu0 %v230
        %284 = vmatprep.subr.mxu0 %v235
        %285 = vmatpush1.msra.mxu0 %v234
        %286 = vmatprep.subr.mxu0 %v239
        %287 = vmatpush1.msra.mxu0 %v238
        %288 = vmatprep.subr.mxu0 %v243
        %289 = vmatpush1.msra.mxu0 %v242
        %290 = vmatprep.subr.mxu0 %v247
        %291 = vmatpush1.msra.mxu0 %v246
        %292 = vmatprep.subr.mxu0 %v251
        %293 = vmatpush1.msra.mxu0 %v250
        %294 = vmatprep.subr.mxu0 %v255
        %295 = vmatpush1.msra.mxu0 %v254
        %296 = vmatprep.subr.mxu0 0.0
        %297 = vmatpush1.msra.mxu0 0.0
        %298 = vmatprep.subr.mxu0 0.0
        %299 = vmatpush1.msra.mxu0 0.0
        %300 = vmatprep.subr.mxu0 0.0
        %301 = vmatpush1.msra.mxu0 0.0
        %302 = vmatprep.subr.mxu0 0.0
        %303 = vmatpush1.msra.mxu0 0.0
        %304 = vmatprep.subr.mxu0 0.0
        %305 = vmatpush1.msra.mxu0 0.0
        %306 = vmatprep.subr.mxu0 0.0
        %307 = vmatpush1.msra.mxu0 0.0
        %308 = vmatprep.subr.mxu0 0.0
        %309 = vmatpush1.msra.mxu0 0.0
        %310 = vmatprep.subr.mxu0 0.0
        %311 = vmatpush1.msra.mxu0 0.0
        %312 = vmatprep.subr.mxu0 0.0
        %313 = vmatpush1.msra.mxu0 0.0
        %314 = vmatprep.subr.mxu0 0.0
        %315 = vmatpush1.msra.mxu0 0.0
        %316 = vmatprep.subr.mxu0 0.0
        %317 = vmatpush1.msra.mxu0 0.0
        %318 = vmatprep.subr.mxu0 0.0
        %319 = vmatpush1.msra.mxu0 0.0
        %320 = vmatprep.subr.mxu0 0.0
        %321 = vmatpush1.msra.mxu0 0.0
        %322 = vmatprep.subr.mxu0 0.0
        %323 = vmatpush1.msra.mxu0 0.0
        %324 = vmatprep.subr.mxu0 0.0
        %325 = vmatpush1.msra.mxu0 0.0
        %326 = vmatprep.subr.mxu0 0.0
        %327 = vmatpush1.msra.mxu0 0.0
        %328 = vmatprep.mubr.f32.mxu0 0.0
        %329 = vmatmul.mubr.f32.gmra.mrb[0].mxu0 %v258
        %v330 = vpop.f32.mrb[0].mxu0
        %v331 = vadd.f32 0.0, %v330
        %v332 = vpop.f32.mrb[0].mxu0
        %v333 = vadd.f32 0.0, %v332
        %334 = vdwg.mxu0
        %335 = vmatprep.subr.mxu0 %v197
        %336 = vmatpush1.msra.mxu0 %v196
        %337 = vmatprep.subr.mxu0 %v201
        %338 = vmatpush1.msra.mxu0 %v200
        %339 = vmatprep.subr.mxu0 %v205
        %340 = vmatpush1.msra.mxu0 %v204
        %341 = vmatprep.subr.mxu0 %v209
        %342 = vmatpush1.msra.mxu0 %v208
        %343 = vmatprep.subr.mxu0 %v213
        %344 = vmatpush1.msra.mxu0 %v212
        %345 = vmatprep.subr.mxu0 %v217
        %346 = vmatpush1.msra.mxu0 %v216
        %347 = vmatprep.subr.mxu0 %v221
        %348 = vmatpush1.msra.mxu0 %v220
        %349 = vmatprep.subr.mxu0 %v225
        %350 = vmatpush1.msra.mxu0 %v224
        %351 = vmatprep.subr.mxu0 %v229
        %352 = vmatpush1.msra.mxu0 %v228
        %353 = vmatprep.subr.mxu0 %v233
        %354 = vmatpush1.msra.mxu0 %v232
        %355 = vmatprep.subr.mxu0 %v237
        %356 = vmatpush1.msra.mxu0 %v236
        %357 = vmatprep.subr.mxu0 %v241
        %358 = vmatpush1.msra.mxu0 %v240
        %359 = vmatprep.subr.mxu0 %v245
        %360 = vmatpush1.msra.mxu0 %v244
        %361 = vmatprep.subr.mxu0 %v249
        %362 = vmatpush1.msra.mxu0 %v248
        %363 = vmatprep.subr.mxu0 %v253
        %364 = vmatpush1.msra.mxu0 %v252
        %365 = vmatprep.subr.mxu0 %v257
        %366 = vmatpush1.msra.mxu0 %v256
        %367 = vmatprep.subr.mxu0 0.0
        %368 = vmatpush1.msra.mxu0 0.0
        %369 = vmatprep.subr.mxu0 0.0
        %370 = vmatpush1.msra.mxu0 0.0
        %371 = vmatprep.subr.mxu0 0.0
        %372 = vmatpush1.msra.mxu0 0.0
        %373 = vmatprep.subr.mxu0 0.0
        %374 = vmatpush1.msra.mxu0 0.0
        %375 = vmatprep.subr.mxu0 0.0
        %376 = vmatpush1.msra.mxu0 0.0
        %377 = vmatprep.subr.mxu0 0.0
        %378 = vmatpush1.msra.mxu0 0.0
        %379 = vmatprep.subr.mxu0 0.0
        %380 = vmatpush1.msra.mxu0 0.0
        %381 = vmatprep.subr.mxu0 0.0
        %382 = vmatpush1.msra.mxu0 0.0
        %383 = vmatprep.subr.mxu0 0.0
        %384 = vmatpush1.msra.mxu0 0.0
        %385 = vmatprep.subr.mxu0 0.0
        %386 = vmatpush1.msra.mxu0 0.0
        %387 = vmatprep.subr.mxu0 0.0
        %388 = vmatpush1.msra.mxu0 0.0
        %389 = vmatprep.subr.mxu0 0.0
        %390 = vmatpush1.msra.mxu0 0.0
        %391 = vmatprep.subr.mxu0 0.0
        %392 = vmatpush1.msra.mxu0 0.0
        %393 = vmatprep.subr.mxu0 0.0
        %394 = vmatpush1.msra.mxu0 0.0
        %395 = vmatprep.subr.mxu0 0.0
        %396 = vmatpush1.msra.mxu0 0.0
        %397 = vmatprep.subr.mxu0 0.0
        %398 = vmatpush1.msra.mxu0 0.0
        %399 = vmatprep.mubr.f32.mxu0 0.0
        %400 = vmatmul.mubr.f32.gmra.mrb[0].mxu0 %v258
        %v401 = vpop.f32.mrb[0].mxu0
        %v402 = vadd.f32 0.0, %v401
        %v403 = vpop.f32.mrb[0].mxu0
        %v404 = vadd.f32 0.0, %v403
        %405 = vdwg.mxu0
        %v406 = vadd.f32 %v260, %v331
        %v407 = vadd.f32 %v261, %v333
        %v408 = vadd.f32 %v262, %v402
        %v409 = vadd.f32 %v263, %v404
        %v410 = vmul.f32 %v406, 0.5
        %v411 = vtanh.pop %v410
        %v412 = vmul.f32 %v411, 0.5
        %v413 = vadd.f32 %v412, 0.5
        %v414 = vmul.f32 %v407, 0.5
        %v415 = vtanh.pop %v414
        %v416 = vmul.f32 %v415, 0.5
        %v417 = vadd.f32 %v416, 0.5
        %v418 = vtanh.pop %v408
        %v419 = vmul.f32 %v409, 0.5
        %v420 = vtanh.pop %v419
        %v421 = vmul.f32 %v420, 0.5
        %v422 = vadd.f32 %v421, 0.5
        %v423 = vmul.f32 %v417, %v259
        %v424 = vmul.f32 %v413, %v418
        %v425 = vadd.f32 %v423, %v424
        %v426 = vtanh.pop %v425
        %v427 = vmul.f32 %v422, %v426
        %s428 = scalar_lea.vmem %s167, 32 [#allocation4]
        %v429 = vld [vmem:[%s428] sm:$0xff]
        %v430 = vld [vmem:[%s428 + $0x8] sm:$0xff]
        %v431 = vld [vmem:[%s428 + $0x10] sm:$0xff]
        %v432 = vld [vmem:[%s428 + $0x18] sm:$0xff]
        %433 = vmatprep.subr.mxu0 %v195
        %434 = vmatpush1.msra.mxu0 %v194
        %435 = vmatprep.subr.mxu0 %v199
        %436 = vmatpush1.msra.mxu0 %v198
        %437 = vmatprep.subr.mxu0 %v203
        %438 = vmatpush1.msra.mxu0 %v202
        %439 = vmatprep.subr.mxu0 %v207
        %440 = vmatpush1.msra.mxu0 %v206
        %441 = vmatprep.subr.mxu0 %v211
        %442 = vmatpush1.msra.mxu0 %v210
        %443 = vmatprep.subr.mxu0 %v215
        %444 = vmatpush1.msra.mxu0 %v214
        %445 = vmatprep.subr.mxu0 %v219
        %446 = vmatpush1.msra.mxu0 %v218
        %447 = vmatprep.subr.mxu0 %v223
        %448 = vmatpush1.msra.mxu0 %v222
        %449 = vmatprep.subr.mxu0 %v227
        %450 = vmatpush1.msra.mxu0 %v226
        %451 = vmatprep.subr.mxu0 %v231
        %452 = vmatpush1.msra.mxu0 %v230
        %453 = vmatprep.subr.mxu0 %v235
        %454 = vmatpush1.msra.mxu0 %v234
        %455 = vmatprep.subr.mxu0 %v239
        %456 = vmatpush1.msra.mxu0 %v238
        %457 = vmatprep.subr.mxu0 %v243
        %458 = vmatpush1.msra.mxu0 %v242
        %459 = vmatprep.subr.mxu0 %v247
        %460 = vmatpush1.msra.mxu0 %v246
        %461 = vmatprep.subr.mxu0 %v251
        %462 = vmatpush1.msra.mxu0 %v250
        %463 = vmatprep.subr.mxu0 %v255
        %464 = vmatpush1.msra.mxu0 %v254
        %465 = vmatprep.subr.mxu0 0.0
        %466 = vmatpush1.msra.mxu0 0.0
        %467 = vmatprep.subr.mxu0 0.0
        %468 = vmatpush1.msra.mxu0 0.0
        %469 = vmatprep.subr.mxu0 0.0
        %470 = vmatpush1.msra.mxu0 0.0
        %471 = vmatprep.subr.mxu0 0.0
        %472 = vmatpush1.msra.mxu0 0.0
        %473 = vmatprep.subr.mxu0 0.0
        %474 = vmatpush1.msra.mxu0 0.0
        %475 = vmatprep.subr.mxu0 0.0
        %476 = vmatpush1.msra.mxu0 0.0
        %477 = vmatprep.subr.mxu0 0.0
        %478 = vmatpush1.msra.mxu0 0.0
        %479 = vmatprep.subr.mxu0 0.0
        %480 = vmatpush1.msra.mxu0 0.0
        %481 = vmatprep.subr.mxu0 0.0
        %482 = vmatpush1.msra.mxu0 0.0
        %483 = vmatprep.subr.mxu0 0.0
        %484 = vmatpush1.msra.mxu0 0.0
        %485 = vmatprep.subr.mxu0 0.0
        %486 = vmatpush1.msra.mxu0 0.0
        %487 = vmatprep.subr.mxu0 0.0
        %488 = vmatpush1.msra.mxu0 0.0
        %489 = vmatprep.subr.mxu0 0.0
        %490 = vmatpush1.msra.mxu0 0.0
        %491 = vmatprep.subr.mxu0 0.0
        %492 = vmatpush1.msra.mxu0 0.0
        %493 = vmatprep.subr.mxu0 0.0
        %494 = vmatpush1.msra.mxu0 0.0
        %495 = vmatprep.subr.mxu0 0.0
        %496 = vmatpush1.msra.mxu0 0.0
        %497 = vmatprep.mubr.f32.mxu0 0.0
        %498 = vmatmul.mubr.f32.gmra.mrb[0].mxu0 %v427
        %v499 = vpop.f32.mrb[0].mxu0
        %v500 = vadd.f32 0.0, %v499
        %v501 = vpop.f32.mrb[0].mxu0
        %v502 = vadd.f32 0.0, %v501
        %503 = vdwg.mxu0
        %504 = vmatprep.subr.mxu0 %v197
        %505 = vmatpush1.msra.mxu0 %v196
        %506 = vmatprep.subr.mxu0 %v201
        %507 = vmatpush1.msra.mxu0 %v200
        %508 = vmatprep.subr.mxu0 %v205
        %509 = vmatpush1.msra.mxu0 %v204
        %510 = vmatprep.subr.mxu0 %v209
        %511 = vmatpush1.msra.mxu0 %v208
        %512 = vmatprep.subr.mxu0 %v213
        %513 = vmatpush1.msra.mxu0 %v212
        %514 = vmatprep.subr.mxu0 %v217
        %515 = vmatpush1.msra.mxu0 %v216
        %516 = vmatprep.subr.mxu0 %v221
        %517 = vmatpush1.msra.mxu0 %v220
        %518 = vmatprep.subr.mxu0 %v225
        %519 = vmatpush1.msra.mxu0 %v224
        %520 = vmatprep.subr.mxu0 %v229
        %521 = vmatpush1.msra.mxu0 %v228
        %522 = vmatprep.subr.mxu0 %v233
        %523 = vmatpush1.msra.mxu0 %v232
        %524 = vmatprep.subr.mxu0 %v237
        %525 = vmatpush1.msra.mxu0 %v236
        %526 = vmatprep.subr.mxu0 %v241
        %527 = vmatpush1.msra.mxu0 %v240
        %528 = vmatprep.subr.mxu0 %v245
        %529 = vmatpush1.msra.mxu0 %v244
        %530 = vmatprep.subr.mxu0 %v249
        %531 = vmatpush1.msra.mxu0 %v248
        %532 = vmatprep.subr.mxu0 %v253
        %533 = vmatpush1.msra.mxu0 %v252
        %534 = vmatprep.subr.mxu0 %v257
        %535 = vmatpush1.msra.mxu0 %v256
        %536 = vmatprep.subr.mxu0 0.0
        %537 = vmatpush1.msra.mxu0 0.0
        %538 = vmatprep.subr.mxu0 0.0
        %539 = vmatpush1.msra.mxu0 0.0
        %540 = vmatprep.subr.mxu0 0.0
        %541 = vmatpush1.msra.mxu0 0.0
        %542 = vmatprep.subr.mxu0 0.0
        %543 = vmatpush1.msra.mxu0 0.0
        %544 = vmatprep.subr.mxu0 0.0
        %545 = vmatpush1.msra.mxu0 0.0
        %546 = vmatprep.subr.mxu0 0.0
        %547 = vmatpush1.msra.mxu0 0.0
        %548 = vmatprep.subr.mxu0 0.0
        %549 = vmatpush1.msra.mxu0 0.0
        %550 = vmatprep.subr.mxu0 0.0
        %551 = vmatpush1.msra.mxu0 0.0
        %552 = vmatprep.subr.mxu0 0.0
        %553 = vmatpush1.msra.mxu0 0.0
        %554 = vmatprep.subr.mxu0 0.0
        %555 = vmatpush1.msra.mxu0 0.0
        %556 = vmatprep.subr.mxu0 0.0
        %557 = vmatpush1.msra.mxu0 0.0
        %558 = vmatprep.subr.mxu0 0.0
        %559 = vmatpush1.msra.mxu0 0.0
        %560 = vmatprep.subr.mxu0 0.0
        %561 = vmatpush1.msra.mxu0 0.0
        %562 = vmatprep.subr.mxu0 0.0
        %563 = vmatpush1.msra.mxu0 0.0
        %564 = vmatprep.subr.mxu0 0.0
        %565 = vmatpush1.msra.mxu0 0.0
        %566 = vmatprep.subr.mxu0 0.0
        %567 = vmatpush1.msra.mxu0 0.0
        %568 = vmatprep.mubr.f32.mxu0 0.0
        %569 = vmatmul.mubr.f32.gmra.mrb[0].mxu0 %v427
        %v570 = vpop.f32.mrb[0].mxu0
        %v571 = vadd.f32 0.0, %v570
        %v572 = vpop.f32.mrb[0].mxu0
        %v573 = vadd.f32 0.0, %v572
        %574 = vdwg.mxu0
        %v575 = vadd.f32 %v429, %v500
        %v576 = vadd.f32 %v430, %v502
        %v577 = vadd.f32 %v431, %v571
        %v578 = vadd.f32 %v432, %v573
        %v579 = vmul.f32 %v575, 0.5
        %v580 = vtanh.pop %v579
        %v581 = vmul.f32 %v580, 0.5
        %v582 = vadd.f32 %v581, 0.5
        %v583 = vmul.f32 %v576, 0.5
        %v584 = vtanh.pop %v583
        %v585 = vmul.f32 %v584, 0.5
        %v586 = vadd.f32 %v585, 0.5
        %v587 = vtanh.pop %v577
        %v588 = vmul.f32 %v578, 0.5
        %v589 = vtanh.pop %v588
        %v590 = vmul.f32 %v589, 0.5
        %v591 = vadd.f32 %v590, 0.5
        %v592 = vmul.f32 %v586, %v425
        %v593 = vmul.f32 %v582, %v587
        %v594 = vadd.f32 %v592, %v593
        %v595 = vtanh.pop %v594
        %v596 = vmul.f32 %v591, %v595
        %s597 = scalar_lea.vmem %s167, 64 [#allocation4]
        %v598 = vld [vmem:[%s597] sm:$0xff]
        %v599 = vld [vmem:[%s597 + $0x8] sm:$0xff]
        %v600 = vld [vmem:[%s597 + $0x10] sm:$0xff]
        %v601 = vld [vmem:[%s597 + $0x18] sm:$0xff]
        %602 = vmatprep.subr.mxu0 %v195
        %603 = vmatpush1.msra.mxu0 %v194
        %604 = vmatprep.subr.mxu0 %v199
        %605 = vmatpush1.msra.mxu0 %v198
        %606 = vmatprep.subr.mxu0 %v203
        %607 = vmatpush1.msra.mxu0 %v202
        %608 = vmatprep.subr.mxu0 %v207
        %609 = vmatpush1.msra.mxu0 %v206
        %610 = vmatprep.subr.mxu0 %v211
        %611 = vmatpush1.msra.mxu0 %v210
        %612 = vmatprep.subr.mxu0 %v215
        %613 = vmatpush1.msra.mxu0 %v214
        %614 = vmatprep.subr.mxu0 %v219
        %615 = vmatpush1.msra.mxu0 %v218
        %616 = vmatprep.subr.mxu0 %v223
        %617 = vmatpush1.msra.mxu0 %v222
        %618 = vmatprep.subr.mxu0 %v227
        %619 = vmatpush1.msra.mxu0 %v226
        %620 = vmatprep.subr.mxu0 %v231
        %621 = vmatpush1.msra.mxu0 %v230
        %622 = vmatprep.subr.mxu0 %v235
        %623 = vmatpush1.msra.mxu0 %v234
        %624 = vmatprep.subr.mxu0 %v239
        %625 = vmatpush1.msra.mxu0 %v238
        %626 = vmatprep.subr.mxu0 %v243
        %627 = vmatpush1.msra.mxu0 %v242
        %628 = vmatprep.subr.mxu0 %v247
        %629 = vmatpush1.msra.mxu0 %v246
        %630 = vmatprep.subr.mxu0 %v251
        %631 = vmatpush1.msra.mxu0 %v250
        %632 = vmatprep.subr.mxu0 %v255
        %633 = vmatpush1.msra.mxu0 %v254
        %634 = vmatprep.subr.mxu0 0.0
        %635 = vmatpush1.msra.mxu0 0.0
        %636 = vmatprep.subr.mxu0 0.0
        %637 = vmatpush1.msra.mxu0 0.0
        %638 = vmatprep.subr.mxu0 0.0
        %639 = vmatpush1.msra.mxu0 0.0
        %640 = vmatprep.subr.mxu0 0.0
        %641 = vmatpush1.msra.mxu0 0.0
        %642 = vmatprep.subr.mxu0 0.0
        %643 = vmatpush1.msra.mxu0 0.0
        %644 = vmatprep.subr.mxu0 0.0
        %645 = vmatpush1.msra.mxu0 0.0
        %646 = vmatprep.subr.mxu0 0.0
        %647 = vmatpush1.msra.mxu0 0.0
        %648 = vmatprep.subr.mxu0 0.0
        %649 = vmatpush1.msra.mxu0 0.0
        %650 = vmatprep.subr.mxu0 0.0
        %651 = vmatpush1.msra.mxu0 0.0
        %652 = vmatprep.subr.mxu0 0.0
        %653 = vmatpush1.msra.mxu0 0.0
        %654 = vmatprep.subr.mxu0 0.0
        %655 = vmatpush1.msra.mxu0 0.0
        %656 = vmatprep.subr.mxu0 0.0
        %657 = vmatpush1.msra.mxu0 0.0
        %658 = vmatprep.subr.mxu0 0.0
        %659 = vmatpush1.msra.mxu0 0.0
        %660 = vmatprep.subr.mxu0 0.0
        %661 = vmatpush1.msra.mxu0 0.0
        %662 = vmatprep.subr.mxu0 0.0
        %663 = vmatpush1.msra.mxu0 0.0
        %664 = vmatprep.subr.mxu0 0.0
        %665 = vmatpush1.msra.mxu0 0.0
        %666 = vmatprep.mubr.f32.mxu0 0.0
        %667 = vmatmul.mubr.f32.gmra.mrb[0].mxu0 %v596
        %v668 = vpop.f32.mrb[0].mxu0
        %v669 = vadd.f32 0.0, %v668
        %v670 = vpop.f32.mrb[0].mxu0
        %v671 = vadd.f32 0.0, %v670
        %672 = vdwg.mxu0
        %673 = vmatprep.subr.mxu0 %v197
        %674 = vmatpush1.msra.mxu0 %v196
        %675 = vmatprep.subr.mxu0 %v201
        %676 = vmatpush1.msra.mxu0 %v200
        %677 = vmatprep.subr.mxu0 %v205
        %678 = vmatpush1.msra.mxu0 %v204
        %679 = vmatprep.subr.mxu0 %v209
        %680 = vmatpush1.msra.mxu0 %v208
        %681 = vmatprep.subr.mxu0 %v213
        %682 = vmatpush1.msra.mxu0 %v212
        %683 = vmatprep.subr.mxu0 %v217
        %684 = vmatpush1.msra.mxu0 %v216
        %685 = vmatprep.subr.mxu0 %v221
        %686 = vmatpush1.msra.mxu0 %v220
        %687 = vmatprep.subr.mxu0 %v225
        %688 = vmatpush1.msra.mxu0 %v224
        %689 = vmatprep.subr.mxu0 %v229
        %690 = vmatpush1.msra.mxu0 %v228
        %691 = vmatprep.subr.mxu0 %v233
        %692 = vmatpush1.msra.mxu0 %v232
        %693 = vmatprep.subr.mxu0 %v237
        %694 = vmatpush1.msra.mxu0 %v236
        %695 = vmatprep.subr.mxu0 %v241
        %696 = vmatpush1.msra.mxu0 %v240
        %697 = vmatprep.subr.mxu0 %v245
        %698 = vmatpush1.msra.mxu0 %v244
        %699 = vmatprep.subr.mxu0 %v249
        %700 = vmatpush1.msra.mxu0 %v248
        %701 = vmatprep.subr.mxu0 %v253
        %702 = vmatpush1.msra.mxu0 %v252
        %703 = vmatprep.subr.mxu0 %v257
        %704 = vmatpush1.msra.mxu0 %v256
        %705 = vmatprep.subr.mxu0 0.0
        %706 = vmatpush1.msra.mxu0 0.0
        %707 = vmatprep.subr.mxu0 0.0
        %708 = vmatpush1.msra.mxu0 0.0
        %709 = vmatprep.subr.mxu0 0.0
        %710 = vmatpush1.msra.mxu0 0.0
        %711 = vmatprep.subr.mxu0 0.0
        %712 = vmatpush1.msra.mxu0 0.0
        %713 = vmatprep.subr.mxu0 0.0
        %714 = vmatpush1.msra.mxu0 0.0
        %715 = vmatprep.subr.mxu0 0.0
        %716 = vmatpush1.msra.mxu0 0.0
        %717 = vmatprep.subr.mxu0 0.0
        %718 = vmatpush1.msra.mxu0 0.0
        %719 = vmatprep.subr.mxu0 0.0
        %720 = vmatpush1.msra.mxu0 0.0
        %721 = vmatprep.subr.mxu0 0.0
        %722 = vmatpush1.msra.mxu0 0.0
        %723 = vmatprep.subr.mxu0 0.0
        %724 = vmatpush1.msra.mxu0 0.0
        %725 = vmatprep.subr.mxu0 0.0
        %726 = vmatpush1.msra.mxu0 0.0
        %727 = vmatprep.subr.mxu0 0.0
        %728 = vmatpush1.msra.mxu0 0.0
        %729 = vmatprep.subr.mxu0 0.0
        %730 = vmatpush1.msra.mxu0 0.0
        %731 = vmatprep.subr.mxu0 0.0
        %732 = vmatpush1.msra.mxu0 0.0
        %733 = vmatprep.subr.mxu0 0.0
        %734 = vmatpush1.msra.mxu0 0.0
        %735 = vmatprep.subr.mxu0 0.0
        %736 = vmatpush1.msra.mxu0 0.0
        %737 = vmatprep.mubr.f32.mxu0 0.0
        %738 = vmatmul.mubr.f32.gmra.mrb[0].mxu0 %v596
        %v739 = vpop.f32.mrb[0].mxu0
        %v740 = vadd.f32 0.0, %v739
        %v741 = vpop.f32.mrb[0].mxu0
        %v742 = vadd.f32 0.0, %v741
        %743 = vdwg.mxu0
        %v744 = vadd.f32 %v598, %v669
        %v745 = vadd.f32 %v599, %v671
        %v746 = vadd.f32 %v600, %v740
        %v747 = vadd.f32 %v601, %v742
        %v748 = vmul.f32 %v744, 0.5
        %v749 = vtanh.pop %v748
        %v750 = vmul.f32 %v749, 0.5
        %v751 = vadd.f32 %v750, 0.5
        %v752 = vmul.f32 %v745, 0.5
        %v753 = vtanh.pop %v752
        %v754 = vmul.f32 %v753, 0.5
        %v755 = vadd.f32 %v754, 0.5
        %v756 = vtanh.pop %v746
        %v757 = vmul.f32 %v747, 0.5
        %v758 = vtanh.pop %v757
        %v759 = vmul.f32 %v758, 0.5
        %v760 = vadd.f32 %v759, 0.5
        %v761 = vmul.f32 %v755, %v594
        %v762 = vmul.f32 %v751, %v756
        %v763 = vadd.f32 %v761, %v762
        %v764 = vtanh.pop %v763
        %v765 = vmul.f32 %v760, %v764
        %766 = vst [vmem:[#allocation2] sm:$0xff] %v765
        %767 = vst [vmem:[#allocation3] sm:$0xff] %v763
        %p768 = scmp.eq.s32.totalorder %s23, 2
        // Predicated region
        $region41: #{tpu_custom_call.1} parent=27 // pred_check
          %p769 = pneg %p768
        $region42: #{tpu_custom_call.1} parent=27 // pred_check_branch
          %771 = sbr.rel (%p769) target = $region44
        $region43: #{tpu_custom_call.1} parent=27 // pred_region
          %772 = vst [vmem:[#allocation9] sm:$0xff] %v765
        $region44: #{tpu_custom_call.1} parent=27 // pred_fallthru
          _
        // Predicated region
        $region45: #{tpu_custom_call.1} parent=27 // pred_check
          %p773 = pneg %p97
        $region46: #{tpu_custom_call.1} parent=27 // pred_check_branch
          %775 = sbr.rel (%p773) target = $region48
        $region47: #{tpu_custom_call.1} parent=27 // pred_region
          %s777 = ssub.s32 128, 128
          %778 = vsyncadd [#allocation6], %s777
          %s779 = smul.addr %s22, 128
          %s780 = scalar_lea.hbm %s2, %s779
          %s782 = sshll.u32 [#allocation9], 4
          %s783 = int_to_ptr.vmem [resolvable:$true] %s782
          %785 = dma.vmem_to_hbm [thread:$0]  %s783, 128, %s780, [#allocation6]
        $region48: #{tpu_custom_call.1} parent=27 // pred_fallthru
          _
        // Predicated region
        $region49: #{tpu_custom_call.1} parent=27 // pred_check
          %p786 = pneg %p97
        $region50: #{tpu_custom_call.1} parent=27 // pred_check_branch
          %788 = sbr.rel (%p786) target = $region52
        $region51: #{tpu_custom_call.1} parent=27 // pred_region
          %789 = dma.done [#allocation6], 128
        $region52: #{tpu_custom_call.1} parent=27 // pred_fallthru
          _
      $region28: #{tpu_custom_call.1} parent=5 // pred_fallthru
        _
      %p790 = scmp.le.s32.totalorder 2, %s13
      // Predicated region
      $region53: #{tpu_custom_call.1} parent=5 // pred_check
        %p791 = pneg %p790
      $region54: #{tpu_custom_call.1} parent=5 // pred_check_branch
        %793 = sbr.rel (%p791) target = $region56
      $region55: #{tpu_custom_call.1} parent=5 // pred_region
        %s794 = ssub.s32 %s13, 2
      $region56: #{tpu_custom_call.1} parent=5 // pred_fallthru
        _
    $region6: #{tpu_custom_call.1} parent=1 // loop_footer
      %s17 = sadd.s32 1, %s13
    $region7: #{tpu_custom_call.1} parent=1 // loop_footer_branch
      %12 = sbr.rel target = $region3
    $region8: #{tpu_custom_call.1} parent=1 // loop_exit
      _
    %795 = vsyncpa [#allocation5], 1
    %s796 = scalar_lea.sflag [#allocation5], 1
    %797 = vsyncpa %s796, 1
    %798 = vsyncpa [#allocation8], 1
    %799 = vsyncpa [#allocation6], 1
    %s800 = scalar_lea.sflag [#allocation6], 1
    %801 = vsyncpa %s800, 1

</llo_original>
